<compile_context>
chip_gen: v7x
topology: tpu7x:2x2x1
jax: 0.10.0
libtpu: 0.0.40
codegen_flags: <defaults>
</compile_context>

<pallas_src>
import numpy as np
import jax
import jax.numpy as jnp
from jax.experimental import pallas as pl
from jax.experimental.pallas import tpu as pltpu


def make_linear_schedule(steps=40):
    """Replicates noise_scheduler.__init__ for beta_type='linear'."""
    beta = 1.0 - 1.0 / (steps - np.arange(1, steps + 1) + 1)
    k_final = [1.0]
    b_final = [0.0]
    for i in range(steps):
        k_final.append(k_final[-1] * beta[i])
        b_final.append(beta[i] * b_final[-1] + 0.5 * (1.0 - beta[i]))
    k_final = np.array(k_final[1:])
    b_final = np.array(b_final[1:])
    k_final = np.hstack([1.0, k_final]).astype(np.float32)   # length steps+1
    b_final = np.hstack([0.0, b_final]).astype(np.float32)   # length steps+1
    beta = np.hstack([1.0, beta]).astype(np.float32)         # length steps+1
    cumbeta = np.cumprod(beta).astype(np.float32)
    return k_final, b_final, beta, cumbeta


def _affine_kernel(k_ref, b_ref, x_ref, o_ref):
    # k_ref, b_ref: VMEM (TB, 1) f32 per-row scalars (broadcast along lanes).
    # x_ref, o_ref: VMEM (TB, TN) tiles.
    x = x_ref[...].astype(jnp.float32)
    o_ref[...] = (x * k_ref[...] + b_ref[...]).astype(o_ref.dtype)


def _round_up(a, m):
    return ((a + m - 1) // m) * m


def _pick_tiles(B, N, itemsize, *, tile_budget_bytes, tb_cap):
    """Pick (TB, TN): TB = packed-sublane multiple, TN from a per-tile byte budget."""
    # Packed sublane unit: 8 (f32/i32), 16 (bf16/f16), 32 (int8/fp8).
    sub_unit = 8 * max(1, 4 // max(1, itemsize))
    TB = min(_round_up(B, sub_unit), _round_up(tb_cap, sub_unit))

    n_padded = _round_up(N, 128)
    tn_budget = (tile_budget_bytes // (TB * itemsize)) // 128 * 128
    TN = max(128, min(tn_budget, n_padded))

    # Single block along batch?  Keep >=2 blocks along N (megacore split on v7x,
    # and something for the pipeline to overlap on single-core chips).
    if pl.cdiv(B, TB) == 1 and TN >= n_padded and n_padded >= 256:
        TN = _round_up(pl.cdiv(n_padded, 2), 128)
    return TB, TN


def noise_scheduler_forward(x, t, k_final, b_final, *,
                            tile_budget_bytes=2 << 20, tb_cap=256):
    """out = k_final[t] * x + b_final[t], broadcasting over all non-batch dims of x."""
    B = x.shape[0]
    N = int(np.prod(x.shape[1:]))
    x2d = x.reshape(B, N)                      # contiguous reshape: metadata only

    TB, TN = _pick_tiles(B, N, jnp.dtype(x.dtype).itemsize,
                         tile_budget_bytes=tile_budget_bytes, tb_cap=tb_cap)
    grid = (pl.cdiv(B, TB), pl.cdiv(N, TN))

    # Per-batch schedule scalars as a (grid_b*TB, 1) f32 column.  The pad is a handful of
    # rows on a (B, 1) array — negligible — and keeps every (TB, 1) block fully in-bounds.
    Bp = grid[0] * TB
    k_t = k_final[t].astype(jnp.float32).reshape(B, 1)
    b_t = b_final[t].astype(jnp.float32).reshape(B, 1)
    if Bp != B:
        k_t = jnp.pad(k_t, ((0, Bp - B), (0, 0)))
        b_t = jnp.pad(b_t, ((0, Bp - B), (0, 0)))

    out2d = pl.pallas_call(
        _affine_kernel,
        out_shape=jax.ShapeDtypeStruct((B, N), x.dtype),
        grid=grid,
        in_specs=[
            pl.BlockSpec((TB, 1), lambda i, j: (i, 0)),
            pl.BlockSpec((TB, 1), lambda i, j: (i, 0)),
            pl.BlockSpec((TB, TN), lambda i, j: (i, j)),
        ],
        out_specs=pl.BlockSpec((TB, TN), lambda i, j: (i, j)),
        compiler_params=pltpu.CompilerParams(
            dimension_semantics=("parallel", "parallel")),
    )(k_t, b_t, x2d)

    return out2d.reshape(x.shape)


if __name__ == "__main__":
    steps = 40
    k_final_np, b_final_np, beta_np, cumbeta_np = make_linear_schedule(steps)
    k_final = jnp.asarray(k_final_np)
    b_final = jnp.asarray(b_final_np)

    key = jax.random.PRNGKey(0)
    kx, kt, kx2, kt2 = jax.random.split(key, 4)

    # ---- main check: f32, NCHW shapes consistent with the module's forward ----
    B, C, H, W = 2, 4, 16, 16
    x = jax.random.uniform(kx, (B, C, H, W), dtype=jnp.float32)
    t = jax.random.randint(kt, (B,), 0, steps + 1, dtype=jnp.int32)

    out = noise_scheduler_forward(x, t, k_final, b_final)
    out = jax.block_until_ready(out)

    k = k_final[t].reshape(B, 1, 1, 1)
    b = b_final[t].reshape(B, 1, 1, 1)
    ref = k * x + b
    np.testing.assert_allclose(np.asarray(out), np.asarray(ref), rtol=1e-6, atol=1e-6)

    # ---- secondary check: ragged shape (exercises masked edge tiles) + bf16 ----
    x2 = jax.random.uniform(kx2, (3, 5, 7, 9), dtype=jnp.float32).astype(jnp.bfloat16)
    t2 = jax.random.randint(kt2, (3,), 0, steps + 1, dtype=jnp.int32)
    out2 = jax.block_until_ready(noise_scheduler_forward(x2, t2, k_final, b_final))
    k2 = k_final[t2].reshape(3, 1, 1, 1)
    b2 = b_final[t2].reshape(3, 1, 1, 1)
    ref2 = (k2 * x2.astype(jnp.float32) + b2).astype(jnp.bfloat16)
    np.testing.assert_allclose(np.asarray(out2, dtype=np.float32),
                               np.asarray(ref2, dtype=np.float32),
                               rtol=1e-2, atol=1e-2)

    print("KERNEL_OK")
</pallas_src>

<mosaic_0001>
module attributes {stable_mosaic.version = 11 : i64} {
  func.func @_affine_kernel(%arg0: i32, %arg1: i32, %arg2: memref<8x1xf32, #tpu.memory_space<vmem>>, %arg3: memref<8x1xf32, #tpu.memory_space<vmem>>, %arg4: memref<8x512xf32, #tpu.memory_space<vmem>>, %arg5: memref<8x512xf32, #tpu.memory_space<vmem>>) attributes {dimension_semantics = [#tpu.dimension_semantics<parallel>, #tpu.dimension_semantics<parallel>], iteration_bounds = array<i64: 1, 2>, scalar_prefetch = 0 : i64, scratch_operands = 0 : i64, tpu.core_type = #tpu.core_type<tc>, window_params = [{transform_indices = @transform_0, window_bounds = array<i64: 8, 1>}, {transform_indices = @transform_1, window_bounds = array<i64: 8, 1>}, {transform_indices = @transform_2, window_bounds = array<i64: 8, 512>}, {transform_indices = @transform_3, window_bounds = array<i64: 8, 512>}]} {
    %c0 = arith.constant 0 : index
    %c0_0 = arith.constant 0 : index
    %0 = vector.load %arg4[%c0, %c0_0] : memref<8x512xf32, #tpu.memory_space<vmem>>, vector<8x512xf32>
    %c0_1 = arith.constant 0 : index
    %c0_2 = arith.constant 0 : index
    %1 = vector.load %arg2[%c0_1, %c0_2] : memref<8x1xf32, #tpu.memory_space<vmem>>, vector<8x1xf32>
    %2 = vector.broadcast %1 : vector<8x1xf32> to vector<8x512xf32>
    %3 = arith.mulf %0, %2 : vector<8x512xf32>
    %c0_3 = arith.constant 0 : index
    %c0_4 = arith.constant 0 : index
    %4 = vector.load %arg3[%c0_3, %c0_4] : memref<8x1xf32, #tpu.memory_space<vmem>>, vector<8x1xf32>
    %5 = vector.broadcast %4 : vector<8x1xf32> to vector<8x512xf32>
    %6 = arith.addf %3, %5 : vector<8x512xf32>
    %c0_5 = arith.constant 0 : index
    %c0_6 = arith.constant 0 : index
    %7 = vector.load %arg5[%c0_5, %c0_6] : memref<8x512xf32, #tpu.memory_space<vmem>>, vector<8x512xf32>
    tpu.vector_store %arg5[%c0_5, %c0_6], %6 {strides = array<i32>} : memref<8x512xf32, #tpu.memory_space<vmem>>, vector<8x512xf32>,
    return
  }
  func.func @transform_0(%arg0: i32, %arg1: i32) -> (i32, i32) {
    %c0_i32 = arith.constant 0 : i32
    %c0_i32_0 = arith.constant 0 : i32
    return %arg0, %c0_i32 : i32, i32
  }
  func.func @transform_1(%arg0: i32, %arg1: i32) -> (i32, i32) {
    %c0_i32 = arith.constant 0 : i32
    %c0_i32_0 = arith.constant 0 : i32
    return %arg0, %c0_i32 : i32, i32
  }
  func.func @transform_2(%arg0: i32, %arg1: i32) -> (i32, i32) {
    %c0_i32 = arith.constant 0 : i32
    return %arg0, %arg1 : i32, i32
  }
  func.func @transform_3(%arg0: i32, %arg1: i32) -> (i32, i32) {
    %c0_i32 = arith.constant 0 : i32
    return %arg0, %arg1 : i32, i32
  }
}

</mosaic_0001>

<llo_original>
// kernel: tpu_custom_call.1
$region0: #{tpu_custom_call.1}
  #allocation0 [shape = 'u32[]', space=smem, size = 0x4, offset = 0x4, fixed_abs, tag = 'smem constant byte address 0x4 - core index']
  #allocation1 [shape = 'u32[144,128]{1,0:T(1,128)}', space=vmem, size = 0x12000, scoped, tag = 'internal scratch']
  %s0 = inlined_call_operand.vmem [shape: f32[8,1], index: 0, kind: input, shape index: {}]
  %s1 = inlined_call_operand.vmem [shape: f32[8,1], index: 1, kind: input, shape index: {}]
  %s2 = inlined_call_operand.vmem [shape: f32[2,1024], index: 2, kind: input, shape index: {}]
  %s3 = inlined_call_operand.hbm [shape: f32[2,1024], index: 3, kind: output, shape index: {}]
  %s4 = sld [smem:[#allocation0]]
  $region83: #{tpu_custom_call.1} parent=0
    _
  %s6 = ssub.s32 1, %s4
  %s7 = scalar_select 0, %s6, %s4
  $region1: #{tpu_custom_call.1} parent=0
    #allocation2 [shape = 'u8[32768]{0}', space=vmem, size = 0x8000, scoped, tag = 'input window, operand 2']
    #allocation3 [shape = 'u8[32768]{0}', space=vmem, size = 0x8000, scoped, tag = 'output window, operand 0']
    #allocation4 [shape = 's32[2]{0}', space=sflag, size = 0x8, scoped, tag = 'scoped memory for tpu_custom_call.1']
    %8 = vsyncpa [#allocation4], 0
    %s9 = scalar_lea.sflag [#allocation4], 1
    %10 = vsyncpa %s9, 0
    loop: start=0, step=1, limit=4
    $region2: #{tpu_custom_call.1} parent=1 // loop_pre_header
      _
    $region3: #{tpu_custom_call.1} parent=1 // loop_header
      %s12 = sphi 0, %s16
      %p13 = scmp.ge.s32.totalorder %s12, 4
      %s19 = sphi 0, %s31
      %s20 = sphi 0, %s27
      %s21 = sphi 0, %s19
      %s22 = sphi 0, %s20
      %s23 = sphi 0, %s21
      %s24 = sphi 0, %s22
      %s34 = sphi 0, %s36
      %s37 = sphi 0, %s34
      %s38 = sphi 0, %s37
      %s54 = sphi 0, %s38
      %s60 = sphi 0, %s62
      %s63 = sphi 0, %s60
      %s64 = sphi 0, %s63
      %s80 = sphi 0, %s64
      %s88 = sphi 0, %s90
      %s91 = sphi 0, %s88
      %s92 = sphi 0, %s91
      %s108 = sphi 0, %s92
      %s116 = sphi 0, %s118
      %s119 = sphi 0, %s116
      %s120 = sphi 0, %s119
      %s136 = sphi 0, %s120
    $region4: #{tpu_custom_call.1} parent=1 // loop_header_branch
      %15 = sbr.rel (%p13) target = $region8
    $region5: #{tpu_custom_call.1} parent=1 // loop_body
      %s17 = ssub.s32 %s12, 1
      %s18 = ssub.s32 %s12, 2
      %s25 = sadd.s32 1, %s20
      %p26 = scmp.ge.s32.totalorder %s25, 2
      %s27 = scalar_select %p26, 0, %s25
      %s28 = sadd.s32 1, %s19
      %s29 = scalar_select %p26, %s28, %s19
      %p30 = scmp.ge.s32.totalorder %s29, 1
      %s31 = scalar_select %p30, 0, %s29
      %s32 = ssub.s32 %s19, %s31
      %p33 = scmp.eq.s32.totalorder %s32, 0
      %s35 = sadd.s32 %s34, 1
      %s36 = scalar_select %p33, %s34, %s35
      %p39 = pneg %p33
      %p40 = scmp.eq.s32.totalorder %s12, 1
      %p41 = por %p39, %p40
      %p42 = scmp.ne.s32.totalorder %s34, %s37
      %p43 = scmp.eq.s32.totalorder %s12, 0
      %p44 = por %p42, %p43
      %p45 = scmp.ne.s32.totalorder %s34, %s37
      %p46 = scmp.eq.s32.totalorder %s17, 1
      %p47 = por %p45, %p46
      %p48 = scmp.ne.s32.totalorder %s37, %s38
      %p49 = scmp.eq.s32.totalorder %s17, 0
      %p50 = por %p48, %p49
      %p51 = scmp.ne.s32.totalorder %s37, %s38
      %p52 = scmp.eq.s32.totalorder %s18, 1
      %p53 = por %p51, %p52
      %p55 = scmp.ne.s32.totalorder %s38, %s54
      %p56 = scmp.eq.s32.totalorder %s18, 0
      %p57 = por %p55, %p56
      %s58 = ssub.s32 %s19, %s31
      %p59 = scmp.eq.s32.totalorder %s58, 0
      %s61 = sadd.s32 %s60, 1
      %s62 = scalar_select %p59, %s60, %s61
      %p65 = pneg %p59
      %p66 = scmp.eq.s32.totalorder %s12, 1
      %p67 = por %p65, %p66
      %p68 = scmp.ne.s32.totalorder %s60, %s63
      %p69 = scmp.eq.s32.totalorder %s12, 0
      %p70 = por %p68, %p69
      %p71 = scmp.ne.s32.totalorder %s60, %s63
      %p72 = scmp.eq.s32.totalorder %s17, 1
      %p73 = por %p71, %p72
      %p74 = scmp.ne.s32.totalorder %s63, %s64
      %p75 = scmp.eq.s32.totalorder %s17, 0
      %p76 = por %p74, %p75
      %p77 = scmp.ne.s32.totalorder %s63, %s64
      %p78 = scmp.eq.s32.totalorder %s18, 1
      %p79 = por %p77, %p78
      %p81 = scmp.ne.s32.totalorder %s64, %s80
      %p82 = scmp.eq.s32.totalorder %s18, 0
      %p83 = por %p81, %p82
      %s84 = ssub.s32 %s19, %s31
      %s85 = ssub.s32 %s20, %s27
      %s86 = sor.u32 %s84, %s85
      %p87 = scmp.eq.s32.totalorder %s86, 0
      %s89 = sadd.s32 %s88, 1
      %s90 = scalar_select %p87, %s88, %s89
      %p93 = pneg %p87
      %p94 = scmp.eq.s32.totalorder %s12, 1
      %p95 = por %p93, %p94
      %p96 = scmp.ne.s32.totalorder %s88, %s91
      %p97 = scmp.eq.s32.totalorder %s12, 0
      %p98 = por %p96, %p97
      %p99 = scmp.ne.s32.totalorder %s88, %s91
      %p100 = scmp.eq.s32.totalorder %s17, 1
      %p101 = por %p99, %p100
      %p102 = scmp.ne.s32.totalorder %s91, %s92
      %p103 = scmp.eq.s32.totalorder %s17, 0
      %p104 = por %p102, %p103
      %p105 = scmp.ne.s32.totalorder %s91, %s92
      %p106 = scmp.eq.s32.totalorder %s18, 1
      %p107 = por %p105, %p106
      %p109 = scmp.ne.s32.totalorder %s92, %s108
      %p110 = scmp.eq.s32.totalorder %s18, 0
      %p111 = por %p109, %p110
      %s112 = ssub.s32 %s19, %s31
      %s113 = ssub.s32 %s20, %s27
      %s114 = sor.u32 %s112, %s113
      %p115 = scmp.eq.s32.totalorder %s114, 0
      %s117 = sadd.s32 %s116, 1
      %s118 = scalar_select %p115, %s116, %s117
      %p121 = pneg %p115
      %p122 = scmp.eq.s32.totalorder %s12, 1
      %p123 = por %p121, %p122
      %p124 = scmp.ne.s32.totalorder %s116, %s119
      %p125 = scmp.eq.s32.totalorder %s12, 0
      %p126 = por %p124, %p125
      %p127 = scmp.ne.s32.totalorder %s116, %s119
      %p128 = scmp.eq.s32.totalorder %s17, 1
      %p129 = por %p127, %p128
      %p130 = scmp.ne.s32.totalorder %s119, %s120
      %p131 = scmp.eq.s32.totalorder %s17, 0
      %p132 = por %p130, %p131
      %p133 = scmp.ne.s32.totalorder %s119, %s120
      %p134 = scmp.eq.s32.totalorder %s18, 1
      %p135 = por %p133, %p134
      %p137 = scmp.ne.s32.totalorder %s120, %s136
      %p138 = scmp.eq.s32.totalorder %s18, 0
      %p139 = por %p137, %p138
      %p140 = scmp.le.s32.totalorder 1, %s12
      %p141 = scmp.lt.s32.totalorder %s12, 3
      %p142 = pnand %p140, %p141
      %p143 = pneg %p142
      // Predicated region
      $region9: #{tpu_custom_call.1} parent=5 // pred_check
        _
      $region10: #{tpu_custom_call.1} parent=5 // pred_check_branch
        %145 = sbr.rel (%p142) target = $region12
      $region11: #{tpu_custom_call.1} parent=5 // pred_region
        %s146 = ssub.s32 %s12, 1
        // Predicated region
        $region13: #{tpu_custom_call.1} parent=11 // pred_check
          %p147 = pneg %p50
        $region14: #{tpu_custom_call.1} parent=11 // pred_check_branch
          %149 = sbr.rel (%p147) target = $region16
        $region15: #{tpu_custom_call.1} parent=11 // pred_region
          %p150 = scmp.lt.s32.totalorder %s21, 0
          %s151 = scalar_select %p150, %s21, 0
          %s152 = smul.addr %s151, 8
          %s153 = scalar_lea.vmem %s0, %s152
        $region16: #{tpu_custom_call.1} parent=11 // pred_fallthru
          _
        // Predicated region
        $region17: #{tpu_custom_call.1} parent=11 // pred_check
          %p154 = pneg %p76
        $region18: #{tpu_custom_call.1} parent=11 // pred_check_branch
          %156 = sbr.rel (%p154) target = $region20
        $region19: #{tpu_custom_call.1} parent=11 // pred_region
          %p157 = scmp.lt.s32.totalorder %s21, 0
          %s158 = scalar_select %p157, %s21, 0
          %s159 = smul.addr %s158, 8
          %s160 = scalar_lea.vmem %s1, %s159
        $region20: #{tpu_custom_call.1} parent=11 // pred_fallthru
          _
      $region12: #{tpu_custom_call.1} parent=5 // pred_fallthru
        _
      %p161 = scmp.lt.s32.totalorder %s12, 2
      // Predicated region
      $region21: #{tpu_custom_call.1} parent=5 // pred_check
        %p162 = pneg %p161
      $region22: #{tpu_custom_call.1} parent=5 // pred_check_branch
        %164 = sbr.rel (%p162) target = $region24
      $region23: #{tpu_custom_call.1} parent=5 // pred_region
        // Predicated region
        $region25: #{tpu_custom_call.1} parent=23 // pred_check
          %p165 = pneg %p98
        $region26: #{tpu_custom_call.1} parent=23 // pred_check_branch
          %167 = sbr.rel (%p165) target = $region28
        $region27: #{tpu_custom_call.1} parent=23 // pred_region
          %s168 = sand.u32 %s88, 1
          %s169 = sand.u32 %s88, 1
          %s170 = smul.addr %s169, 32
          %s171 = scalar_lea.vmem [#allocation2], %s170
          %s172 = smul.u32 4, %s19
          %s173 = smul.u32 4, %s20
          %s174 = ssub.s32 1, %s172
          %s175 = smul.u32 32, %s174
          %s176 = smul.u32 %s175, 4
          %p177 = scmp.ne.s32.totalorder 0, %s176
          %s178 = smul.addr %s172, 8
          %s179 = sadd.s32 %s173, %s178
          %s180 = smul.addr %s179, 2
          %s181 = scalar_lea.vmem %s2, %s180
          // Predicated region
          $region29: #{tpu_custom_call.1} parent=27 // pred_check
            %p182 = pneg %p177
          $region30: #{tpu_custom_call.1} parent=27 // pred_check_branch
            %184 = sbr.rel (%p182) target = $region32
          $region31: #{tpu_custom_call.1} parent=27 // pred_region
            // Predicated region
            $region33: #{tpu_custom_call.1} parent=31 // pred_check
              _
            $region34: #{tpu_custom_call.1} parent=31 // pred_check_branch
              %186 = sbr.rel (0) target = $region36
            $region35: #{tpu_custom_call.1} parent=31 // pred_region
              // Predicated region
              $region48: #{tpu_custom_call.1} parent=35 // pred_check
                _
              $region49: #{tpu_custom_call.1} parent=35 // pred_check_branch
                %209 = sbr.rel (0) target = $region51
              $region50: #{tpu_custom_call.1} parent=35 // pred_region
                // While loop
                $region52: #{tpu_custom_call.1} parent=50 // loop_pre_header
                  _
                $region53: #{tpu_custom_call.1} parent=50 // loop_header
                  %s211 = sphi 0, %s213
                  %p212 = scmp.ge.s32.totalorder %s211, %s174
                  %s216 = sphi 0, %s223
                  %s217 = sphi %s181, %s226
                  %s218 = sphi %s171, %s227
                $region54: #{tpu_custom_call.1} parent=50 // loop_header_branch
                  %215 = sbr.rel (%p212) target = $region58
                $region55: #{tpu_custom_call.1} parent=50 // loop_body
                  %v219 = vld [vmem:[%s217] sm:$0xff]
                  %220 = vst [vmem:[%s218] sm:$0xff] %v219
                  %s221 = sadd.s32 1, %s216
                  %p222 = scmp.ge.s32.totalorder %s221, %s174
                  %s223 = scalar_select %p222, 0, %s221
                  %s224 = smul.u32 %s223, 16
                  %s225 = smul.u32 %s223, 8
                  %s226 = scalar_lea.vmem %s181, %s224
                  %s227 = scalar_lea.vmem %s171, %s225 [#allocation2]
                $region56: #{tpu_custom_call.1} parent=50 // loop_footer
                  %s213 = sadd.s32 %s211, 1
                $region57: #{tpu_custom_call.1} parent=50 // loop_footer_branch
                  %210 = sbr.rel target = $region53
                $region58: #{tpu_custom_call.1} parent=50 // loop_exit
                  _
              $region51: #{tpu_custom_call.1} parent=35 // pred_fallthru
                _
              // Predicated region
              $region59: #{tpu_custom_call.1} parent=35 // pred_check
                _
              $region60: #{tpu_custom_call.1} parent=35 // pred_check_branch
                %229 = sbr.rel target = $region62
              $region61: #{tpu_custom_call.1} parent=35 // pred_region
                _
              $region62: #{tpu_custom_call.1} parent=35 // pred_fallthru
                _
            $region36: #{tpu_custom_call.1} parent=31 // pred_fallthru
              _
            // Predicated region
            $region37: #{tpu_custom_call.1} parent=31 // pred_check
              _
            $region38: #{tpu_custom_call.1} parent=31 // pred_check_branch
              %188 = sbr.rel target = $region40
            $region39: #{tpu_custom_call.1} parent=31 // pred_region
              // While loop
              $region41: #{tpu_custom_call.1} parent=39 // loop_pre_header
                _
              $region42: #{tpu_custom_call.1} parent=39 // loop_header
                %s191 = sphi 0, %s193
                %p192 = scmp.ge.s32.totalorder %s191, %s174
                %s196 = sphi 0, %s203
                %s197 = sphi %s181, %s206
                %s198 = sphi %s171, %s207
              $region43: #{tpu_custom_call.1} parent=39 // loop_header_branch
                %195 = sbr.rel (%p192) target = $region47
              $region44: #{tpu_custom_call.1} parent=39 // loop_body
                %v199 = vld [vmem:[%s197] sm:$0xff]
                %200 = vst [vmem:[%s198] sm:$0xff] %v199
                %s201 = sadd.s32 1, %s196
                %p202 = scmp.ge.s32.totalorder %s201, %s174
                %s203 = scalar_select %p202, 0, %s201
                %s204 = smul.u32 %s203, 16
                %s205 = smul.u32 %s203, 8
                %s206 = scalar_lea.vmem %s181, %s204
                %s207 = scalar_lea.vmem %s171, %s205 [#allocation2]
              $region45: #{tpu_custom_call.1} parent=39 // loop_footer
                %s193 = sadd.s32 %s191, 1
              $region46: #{tpu_custom_call.1} parent=39 // loop_footer_branch
                %190 = sbr.rel target = $region42
              $region47: #{tpu_custom_call.1} parent=39 // loop_exit
                _
            $region40: #{tpu_custom_call.1} parent=31 // pred_fallthru
              _
          $region32: #{tpu_custom_call.1} parent=27 // pred_fallthru
            _
          %230 = vnop
        $region28: #{tpu_custom_call.1} parent=23 // pred_fallthru
          _
      $region24: #{tpu_custom_call.1} parent=5 // pred_fallthru
        _
      %p231 = scmp.le.s32.totalorder 1, %s12
      %p232 = scmp.lt.s32.totalorder %s12, 3
      %p233 = pnand %p231, %p232
      %p234 = pneg %p233
      // Predicated region
      $region63: #{tpu_custom_call.1} parent=5 // pred_check
        _
      $region64: #{tpu_custom_call.1} parent=5 // pred_check_branch
        %236 = sbr.rel (%p233) target = $region66
      $region65: #{tpu_custom_call.1} parent=5 // pred_region
        %s237 = ssub.s32 %s12, 1
        %s238 = sand.u32 %s91, 1
        %s239 = sand.u32 %s91, 1
        %s240 = smul.addr %s239, 32
        %s241 = scalar_lea.vmem [#allocation2], %s240
        // Predicated region
        $region67: #{tpu_custom_call.1} parent=65 // pred_check
          %p242 = pneg %p104
        $region68: #{tpu_custom_call.1} parent=65 // pred_check_branch
          %244 = sbr.rel (%p242) target = $region70
        $region69: #{tpu_custom_call.1} parent=65 // pred_region
          _
        $region70: #{tpu_custom_call.1} parent=65 // pred_fallthru
          _
        %p245 = scmp.lt.s32.totalorder %s21, 0
        %s246 = scalar_select %p245, %s21, 0
        %s247 = smul.addr %s246, 8
        %s248 = scalar_lea.vmem %s0, %s247
        %p249 = pneg %p50
        %p250 = pneg %p47
        %p251 = scmp.lt.s32.totalorder %s21, 0
        %s252 = scalar_select %p251, %s21, 0
        %s253 = smul.addr %s252, 8
        %s254 = scalar_lea.vmem %s1, %s253
        %p255 = pneg %p76
        %p256 = pneg %p73
        %s257 = sand.u32 %s91, 1
        %s258 = sand.u32 %s91, 1
        %s259 = smul.addr %s258, 32
        %s260 = scalar_lea.vmem [#allocation2], %s259
        %p261 = pneg %p104
        %p262 = pneg %p101
        %p263 = pneg %p132
        %p264 = pneg %p129
        %s265 = sand.u32 %s119, 1
        %s266 = scalar_lea.sflag [#allocation4], %s265
        %s267 = sand.u32 %s119, 1
        %s268 = smul.addr %s267, 32
        %s269 = scalar_lea.vmem [#allocation3], %s268
        %p270 = scmp.lt.s32.totalorder %s21, 0
        %s271 = scalar_select %p270, %s21, 0
        %s272 = smul.addr %s271, 8
        %s273 = scalar_lea.vmem %s0, %s272
        %p274 = scmp.lt.s32.totalorder %s21, 0
        %s275 = scalar_select %p274, %s21, 0
        %s276 = smul.addr %s275, 8
        %s277 = scalar_lea.vmem %s1, %s276
        %s278 = smul.u32 4, %s21
        %s279 = smul.u32 4, %s22
        %s280 = ssub.s32 1, %s278
        %s281 = smul.u32 32, %s280
        %s282 = smul.u32 %s281, 4
        %s283 = smul.u32 4, %s21
        %s284 = smul.u32 4, %s22
        %s285 = ssub.s32 1, %s283
        %s286 = smul.u32 32, %s285
        %s287 = smul.u32 %s286, 4
        %v288 = vld [vmem:[%s241] sm:$0xff]
        %v289 = vld [vmem:[%s241 + $0x8] sm:$0xff]
        %v290 = vld [vmem:[%s241 + $0x10] sm:$0xff]
        %v291 = vld [vmem:[%s241 + $0x18] sm:$0xff]
        %v292 = vld [vmem:[%s273] sm:$0xff]
        %294 = vset.pattern.permute.xlu0 0
        %295 = vperm.xlu0 %294, %v292
        %v296 = vpop.permute.xlu0 %295
        %v298 = vunpack.c.l.s4 269488144
        %v299 = vunpack.c.0.s8 %v298
        %v300 = vlaneseq
        %v301 = vshrl.u32 %v300, 7
        %v302 = vsub.s32 %v299, %v301
        %v303 = vrot.slane %v296, %v302
        %v305 = vunpack.c.l.s4 842150450
        %v306 = vunpack.c.0.s8 %v305
        %v307 = vlaneseq
        %v308 = vshrl.u32 %v307, 7
        %v309 = vsub.s32 %v306, %v308
        %v310 = vrot.slane %v296, %v309
        %v312 = vunpack.c.l.s4 1414812756
        %v313 = vunpack.c.0.s8 %v312
        %v314 = vlaneseq
        %v315 = vshrl.u32 %v314, 7
        %v316 = vsub.s32 %v313, %v315
        %v317 = vrot.slane %v296, %v316
        %v319 = vunpack.c.l.s4 1987475062
        %v320 = vunpack.c.0.s8 %v319
        %v321 = vlaneseq
        %v322 = vshrl.u32 %v321, 7
        %v323 = vsub.s32 %v320, %v322
        %v324 = vrot.slane %v296, %v323
        %v329 = vmul.f32 %v288, %v303
        %v330 = vmul.f32 %v289, %v310
        %v331 = vmul.f32 %v290, %v317
        %v332 = vmul.f32 %v291, %v324
        %v333 = vld [vmem:[%s277] sm:$0xff]
        %335 = vset.pattern.permute.xlu0 0
        %336 = vperm.xlu0 %335, %v333
        %v337 = vpop.permute.xlu0 %336
        %v339 = vunpack.c.l.s4 269488144
        %v340 = vunpack.c.0.s8 %v339
        %v341 = vlaneseq
        %v342 = vshrl.u32 %v341, 7
        %v343 = vsub.s32 %v340, %v342
        %v344 = vrot.slane %v337, %v343
        %v346 = vunpack.c.l.s4 842150450
        %v347 = vunpack.c.0.s8 %v346
        %v348 = vlaneseq
        %v349 = vshrl.u32 %v348, 7
        %v350 = vsub.s32 %v347, %v349
        %v351 = vrot.slane %v337, %v350
        %v353 = vunpack.c.l.s4 1414812756
        %v354 = vunpack.c.0.s8 %v353
        %v355 = vlaneseq
        %v356 = vshrl.u32 %v355, 7
        %v357 = vsub.s32 %v354, %v356
        %v358 = vrot.slane %v337, %v357
        %v360 = vunpack.c.l.s4 1987475062
        %v361 = vunpack.c.0.s8 %v360
        %v362 = vlaneseq
        %v363 = vshrl.u32 %v362, 7
        %v364 = vsub.s32 %v361, %v363
        %v365 = vrot.slane %v337, %v364
        %v370 = vadd.f32 %v329, %v344
        %v371 = vadd.f32 %v330, %v351
        %v372 = vadd.f32 %v331, %v358
        %v373 = vadd.f32 %v332, %v365
        %374 = vst [vmem:[%s269] sm:$0xff] %v370
        %375 = vst [vmem:[%s269 + $0x8] sm:$0xff] %v371
        %376 = vst [vmem:[%s269 + $0x10] sm:$0xff] %v372
        %377 = vst [vmem:[%s269 + $0x18] sm:$0xff] %v373
        %s378 = sand.u32 %s119, 1
        %s379 = scalar_lea.sflag [#allocation4], %s378
        %s380 = sand.u32 %s119, 1
        %s381 = smul.addr %s380, 32
        %s382 = scalar_lea.vmem [#allocation3], %s381
        // Predicated region
        $region71: #{tpu_custom_call.1} parent=65 // pred_check
          %p383 = pneg %p129
        $region72: #{tpu_custom_call.1} parent=65 // pred_check_branch
          %385 = sbr.rel (%p383) target = $region74
        $region73: #{tpu_custom_call.1} parent=65 // pred_region
          %s386 = smul.u32 4, %s21
          %s387 = smul.u32 4, %s22
          %s388 = ssub.s32 1, %s386
          %s389 = smul.u32 32, %s388
          %s390 = smul.u32 %s389, 4
          %s392 = ssub.s32 512, %s390
          %393 = vsyncadd %s379, %s392
          %p394 = scmp.ne.s32.totalorder 0, %s390
          %s395 = smul.addr %s386, 8
          %s396 = sadd.s32 %s387, %s395
          %s397 = smul.addr %s396, 32
          %s398 = scalar_lea.hbm %s3, %s397
          %s399 = smul.u32 8, %s388
          %s400 = sshll.u32 %s382, 4
          %s401 = int_to_ptr.vmem [resolvable:$true] %s400
          %s402 = sshll.u32 %s399, 4
          %406 = dma.vmem_to_hbm [thread:$0]  (%p394), %s401, %s402, %s398, %s379, 128, 256, 8
        $region74: #{tpu_custom_call.1} parent=65 // pred_fallthru
          _
      $region66: #{tpu_custom_call.1} parent=5 // pred_fallthru
        _
      %p407 = scmp.le.s32.totalorder 2, %s12
      // Predicated region
      $region75: #{tpu_custom_call.1} parent=5 // pred_check
        %p408 = pneg %p407
      $region76: #{tpu_custom_call.1} parent=5 // pred_check_branch
        %410 = sbr.rel (%p408) target = $region78
      $region77: #{tpu_custom_call.1} parent=5 // pred_region
        %s411 = ssub.s32 %s12, 2
        // Predicated region
        $region79: #{tpu_custom_call.1} parent=77 // pred_check
          %p412 = pneg %p135
        $region80: #{tpu_custom_call.1} parent=77 // pred_check_branch
          %414 = sbr.rel (%p412) target = $region82
        $region81: #{tpu_custom_call.1} parent=77 // pred_region
          %s415 = sand.u32 %s120, 1
          %s416 = scalar_lea.sflag [#allocation4], %s415
          %s417 = sand.u32 %s120, 1
          %s418 = smul.addr %s417, 32
          %s419 = scalar_lea.vmem [#allocation3], %s418
          %420 = dma.done %s416, 512
        $region82: #{tpu_custom_call.1} parent=77 // pred_fallthru
          _
      $region78: #{tpu_custom_call.1} parent=5 // pred_fallthru
        _
    $region6: #{tpu_custom_call.1} parent=1 // loop_footer
      %s16 = sadd.s32 1, %s12
    $region7: #{tpu_custom_call.1} parent=1 // loop_footer_branch
      %11 = sbr.rel target = $region3
    $region8: #{tpu_custom_call.1} parent=1 // loop_exit
      _
    %421 = vsyncpa [#allocation4], 1
    %s422 = scalar_lea.sflag [#allocation4], 1
    %423 = vsyncpa %s422, 1

</llo_original>
